<compile_context>
chip_gen: v7x
topology: tpu7x:2x2x1
jax: 0.10.0
libtpu: 0.0.40
codegen_flags: <defaults>
</compile_context>

<pallas_src>
import jax
import jax.numpy as jnp
import numpy as np
from jax.experimental import pallas as pl
from jax.experimental.pallas import tpu as pltpu

EPS = 1e-7
MASK_FILL = -1e9


# ---------------------------------------------------------------------------
# Pallas kernels
# ---------------------------------------------------------------------------

def delta_bias_kernel(wm_ref, bm_ref, bias_ref):
    """bias[i, j] = 1 / log(relu((|i-j| + eps) @ Wm + bm) + 2*eps)  (param-only)."""
    S = bias_ref.shape[0]
    i = jax.lax.broadcasted_iota(jnp.int32, (S, S), 0).astype(jnp.float32)
    j = jax.lax.broadcasted_iota(jnp.int32, (S, S), 1).astype(jnp.float32)
    delta = jnp.abs(i - j) + EPS
    dm = jnp.dot(delta, wm_ref[...], preferred_element_type=jnp.float32,
                 precision=jax.lax.Precision.HIGHEST) + bm_ref[...]
    dm = jnp.maximum(dm, 0.0)                                   # ReLU
    bias_ref[...] = 1.0 / jnp.log(dm + 2.0 * EPS)


def attention_agg_kernel(x_ref, m_ref, bias_ref, wqkv_ref, wl_ref, bl_ref, o_ref):
    """AttentionAgg2 forward for a block of BB batch elements."""
    BB, S, D = x_ref.shape

    # ---- fused Q/K/V projection: (BB*S, D) @ (D, 3D), bf16 out (f32 accum) ----
    xb = x_ref[...].astype(jnp.bfloat16).reshape(BB * S, D)
    qkv = jnp.dot(xb, wqkv_ref[...], preferred_element_type=jnp.bfloat16)
    q = qkv[:, :D].reshape(BB, S, D)
    k = qkv[:, D:2 * D].reshape(BB, S, D)
    v = qkv[:, 2 * D:].reshape(BB, S, D)

    # key-padding predicate, computed once and reused (no duplicated broadcast)
    key_pad = m_ref[...] == 0.0                          # (BB, 1, S) bool

    # ---- attention scores + distance bias + mask (no 1/sqrt(d) in reference) ----
    wei = jnp.einsum('bqd,bkd->bqk', q, k,
                     preferred_element_type=jnp.float32)  # (BB, S, S) f32
    wei = wei + bias_ref[...]                             # (S, S) broadcast over BB
    wei = jnp.where(key_pad, MASK_FILL, wei)

    # row softmax (f32; reciprocal on the EUP slot)
    wei = wei - jnp.max(wei, axis=-1, keepdims=True)
    p = jnp.exp(wei)
    p = p * pl.reciprocal(jnp.sum(p, axis=-1, keepdims=True), approx=True)

    out = jnp.einsum('bqk,bkd->bqd', p.astype(jnp.bfloat16), v,
                     preferred_element_type=jnp.float32)  # (BB, S, D) f32

    # ---- per-position pooling logits: <out, wl> along D (cheap VPU/XLU path) ----
    wl = wl_ref[...]                                      # (1, D) f32
    logits = jnp.sum(out * wl[None, :, :], axis=-1) + bl_ref[0]   # (BB, S)
    logits = jnp.where(key_pad[:, 0, :], MASK_FILL, logits)
    logits = logits - jnp.max(logits, axis=-1, keepdims=True)
    aw = jnp.exp(logits)
    aw = aw * pl.reciprocal(jnp.sum(aw, axis=-1, keepdims=True), approx=True)

    # pooled output: sum_s aw[b,s] * out[b,s,:]  -> lane-dense (BB, D) store
    o_ref[...] = jnp.sum(out * aw[:, :, None], axis=1).astype(o_ref.dtype)


# ---------------------------------------------------------------------------
# Factory: precompute param-only tensors once, return a jitted forward
# ---------------------------------------------------------------------------

def build_attention_agg2(params, *, emb_dim, seq_len, block_b=8):
    S, D = seq_len, emb_dim
    S_pad = ((S + 127) // 128) * 128          # pad seq to a multiple of 128

    # (1) distance-bias table: computed ONCE per parameter set, cached via closure
    bias = pl.pallas_call(
        delta_bias_kernel,
        out_shape=jax.ShapeDtypeStruct((S, S), jnp.float32),
    )(params["wm_t"].astype(jnp.float32), params["bm"].astype(jnp.float32))
    bias = jnp.pad(bias, ((0, S_pad - S), (0, S_pad - S)))          # padded keys are masked

    # (2) fused QKV weight (D, 3D) in bf16, resident in VMEM across the batch grid
    wqkv = jnp.concatenate(
        [params["wq_t"], params["wk_t"], params["wv_t"]], axis=1).astype(jnp.bfloat16)
    wl = params["wl_row"].astype(jnp.float32)                        # (1, D)
    bl = params["bl"].reshape((1,)).astype(jnp.float32)              # (1,) scalar -> SMEM

    @jax.jit
    def forward(x, mask):
        B = x.shape[0]
        BB = block_b
        B_pad = ((B + BB - 1) // BB) * BB
        xp = jnp.pad(x, ((0, B_pad - B), (0, S_pad - S), (0, 0)))    # keep upstream dtype
        mp = jnp.pad(mask.astype(jnp.float32),
                     ((0, B_pad - B), (0, S_pad - S))).reshape(B_pad, 1, S_pad)

        out = pl.pallas_call(
            attention_agg_kernel,
            out_shape=jax.ShapeDtypeStruct((B_pad, D), jnp.float32),
            grid=(B_pad // BB,),
            in_specs=[
                pl.BlockSpec((BB, S_pad, D), lambda b: (b, 0, 0)),        # x block
                pl.BlockSpec((BB, 1, S_pad), lambda b: (b, 0, 0)),        # mask block
                pl.BlockSpec((S_pad, S_pad), lambda b: (0, 0)),           # bias (resident)
                pl.BlockSpec((D, 3 * D), lambda b: (0, 0)),               # fused QKV (resident)
                pl.BlockSpec((1, D), lambda b: (0, 0)),                   # pooling weight row
                pl.BlockSpec(memory_space=pltpu.MemorySpace.SMEM),        # pooling bias scalar
            ],
            out_specs=pl.BlockSpec((BB, D), lambda b: (b, 0)),            # lane-dense (BB, D)
            compiler_params=pltpu.CompilerParams(
                dimension_semantics=("parallel",)),
        )(xp, mp, bias, wqkv, wl, bl)
        return out[:B]

    return forward


# ---------------------------------------------------------------------------
# Deterministic synthetic parameters (mirrors __init__ shapes)
# ---------------------------------------------------------------------------

def init_params(key, *, emb_dim, seq_len):
    std = 0.02
    ks = jax.random.split(key, 6)

    def nrm(k, shape, s=std):
        return s * jax.random.normal(k, shape, dtype=jnp.float32)

    return dict(
        # projection weights stored transposed (in, out) so kernels right-multiply
        wq_t=nrm(ks[0], (emb_dim, emb_dim)),
        wk_t=nrm(ks[1], (emb_dim, emb_dim)),
        wv_t=nrm(ks[2], (emb_dim, emb_dim)),
        wm_t=nrm(ks[3], (seq_len, seq_len)),
        bm=nrm(ks[4], (1, seq_len)),
        wl_row=nrm(ks[5], (1, emb_dim)),      # nn.Linear(emb_dim, 1).weight
        bl=jnp.full((1, 1), 0.05, jnp.float32),
    )


# ---------------------------------------------------------------------------
# Pure-JAX reference (direct transcription of the PyTorch forward)
# ---------------------------------------------------------------------------

def ref_forward(x, mask, params):
    B, S, D = x.shape
    hi = jax.lax.Precision.HIGHEST
    r = jnp.arange(S, dtype=jnp.float32)
    delta = jnp.abs(r[:, None] - r[None, :]) + EPS
    delta = jax.nn.relu(jnp.dot(delta, params["wm_t"], precision=hi) + params["bm"][0])
    bias = 1.0 / jnp.log(delta + 2.0 * EPS)

    q = jnp.einsum('bsd,de->bse', x, params["wq_t"], precision=hi)
    k = jnp.einsum('bsd,de->bse', x, params["wk_t"], precision=hi)
    v = jnp.einsum('bsd,de->bse', x, params["wv_t"], precision=hi)
    wei = jnp.einsum('bqd,bkd->bqk', q, k, precision=hi) + bias[None]
    wei = jnp.where((mask == 0)[:, None, :], MASK_FILL, wei)
    wei = jax.nn.softmax(wei, axis=-1)
    out = jnp.einsum('bqk,bkd->bqd', wei, v, precision=hi)

    aw = jnp.einsum('bqd,d->bq', out, params["wl_row"][0], precision=hi) + params["bl"][0, 0]
    aw = jnp.where(mask == 0, MASK_FILL, aw)
    aw = jax.nn.softmax(aw, axis=-1)
    return jnp.einsum('bq,bqd->bd', aw, out, precision=hi)


# ---------------------------------------------------------------------------

if __name__ == "__main__":
    B, S, D = 16, 8, 128          # batch=16, seq_len=8 (w_m is Linear(8,8)), emb_dim=128
    key = jax.random.PRNGKey(0)
    kp, kx, kl = jax.random.split(key, 3)
    params = init_params(kp, emb_dim=D, seq_len=S)
    x = jax.random.normal(kx, (B, S, D), dtype=jnp.float32)
    lengths = jax.random.randint(kl, (B,), 1, S + 1)
    mask = (jnp.arange(S)[None, :] < lengths[:, None]).astype(jnp.float32)   # (B, S); 0 == pad

    # build once per parameter set (bias table + fused weights cached in closure)
    fwd = build_attention_agg2(params, emb_dim=D, seq_len=S, block_b=8)

    out = jax.block_until_ready(fwd(x, mask))

    ref = ref_forward(x, mask, params)
    np.testing.assert_allclose(np.asarray(out), np.asarray(ref), rtol=5e-2, atol=5e-3)

    print("KERNEL_OK")
</pallas_src>

<mosaic_0001>
module attributes {stable_mosaic.version = 11 : i64} {
  func.func @delta_bias_kernel(%arg0: memref<8x8xf32, #tpu.memory_space<vmem>>, %arg1: memref<1x8xf32, #tpu.memory_space<vmem>>, %arg2: memref<8x8xf32, #tpu.memory_space<vmem>>) attributes {dimension_semantics = [], scalar_prefetch = 0 : i64, scratch_operands = 0 : i64, tpu.core_type = #tpu.core_type<tc>} {
    %0 = tpu.iota {dimensions = array<i32: 0>} : vector<8x8xi32>
    %1 = arith.sitofp %0 : vector<8x8xi32> to vector<8x8xf32>
    %2 = tpu.iota {dimensions = array<i32: 1>} : vector<8x8xi32>
    %3 = arith.sitofp %2 : vector<8x8xi32> to vector<8x8xf32>
    %4 = arith.subf %1, %3 : vector<8x8xf32>
    %5 = math.absf %4 : vector<8x8xf32>
    %cst = arith.constant 1.000000e-07 : f32
    %6 = vector.broadcast %cst : f32 to vector<8x8xf32>
    %7 = arith.addf %5, %6 : vector<8x8xf32>
    %c0 = arith.constant 0 : index
    %c0_0 = arith.constant 0 : index
    %8 = vector.load %arg0[%c0, %c0_0] : memref<8x8xf32, #tpu.memory_space<vmem>>, vector<8x8xf32>
    %cst_1 = arith.constant dense<0.000000e+00> : vector<8x8xf32>
    %9 = tpu.matmul %7, %8, %cst_1 {dimension_numbers = #tpu.dot_dimension_numbers<[1], [0], [0], [1], [0, 0, 1, 1], [], []>, precision = #tpu.contract_precision<fp32>} : vector<8x8xf32>, vector<8x8xf32>, vector<8x8xf32> -> vector<8x8xf32>
    %c0_2 = arith.constant 0 : index
    %c0_3 = arith.constant 0 : index
    %10 = vector.load %arg1[%c0_2, %c0_3] : memref<1x8xf32, #tpu.memory_space<vmem>>, vector<1x8xf32>
    %11 = vector.broadcast %10 : vector<1x8xf32> to vector<8x8xf32>
    %12 = arith.addf %9, %11 : vector<8x8xf32>
    %cst_4 = arith.constant 0.000000e+00 : f32
    %13 = vector.broadcast %cst_4 : f32 to vector<8x8xf32>
    %14 = arith.maximumf %12, %13 : vector<8x8xf32>
    %cst_5 = arith.constant 2.000000e-07 : f32
    %15 = vector.broadcast %cst_5 : f32 to vector<8x8xf32>
    %16 = arith.addf %14, %15 : vector<8x8xf32>
    %17 = math.log %16 : vector<8x8xf32>
    %cst_6 = arith.constant 1.000000e+00 : f32
    %18 = vector.broadcast %cst_6 : f32 to vector<8x8xf32>
    %19 = arith.divf %18, %17 : vector<8x8xf32>
    %c0_7 = arith.constant 0 : index
    %c0_8 = arith.constant 0 : index
    %20 = vector.load %arg2[%c0_7, %c0_8] : memref<8x8xf32, #tpu.memory_space<vmem>>, vector<8x8xf32>
    tpu.vector_store %arg2[%c0_7, %c0_8], %19 {strides = array<i32>} : memref<8x8xf32, #tpu.memory_space<vmem>>, vector<8x8xf32>,
    return
  }
}

</mosaic_0001>

<llo_original>
// kernel: tpu_custom_call.1
$region0: #{tpu_custom_call.1}
  #allocation0 [shape = 'u32[]', space=smem, size = 0x4, offset = 0x4, fixed_abs, tag = 'smem constant byte address 0x4 - core index']
  #allocation1 [shape = 'u32[144,128]{1,0:T(1,128)}', space=vmem, size = 0x12000, scoped, tag = 'internal scratch']
  %s0 = inlined_call_operand.hbm [shape: f32[8,8], index: 0, kind: input, shape index: {}]
  %s1 = inlined_call_operand.vmem [shape: f32[1,8], index: 1, kind: input, shape index: {}]
  %s2 = inlined_call_operand.hbm [shape: f32[8,8], index: 2, kind: output, shape index: {}]
  %s3 = sld [smem:[#allocation0]]
  $region22: #{tpu_custom_call.1} parent=0
    _
  %s5 = ssub.s32 1, %s3
  %s6 = scalar_select 0, %s5, %s3
  $region1: #{tpu_custom_call.1} parent=0
    #allocation2 [shape = 'u8[4096]{0}', space=vmem, size = 0x1000, scoped, tag = 'input window, operand 0, single buffered']
    #allocation3 [shape = 's32[1]{0}', space=sflag, size = 0x4, scoped, tag = 'scoped memory for tpu_custom_call.1']
    #allocation4 [shape = 's32[1]{0}', space=sflag, size = 0x4, scoped, tag = 'scoped memory for tpu_custom_call.1']
    #allocation5 [shape = 'u8[4096]{0}', space=vmem, size = 0x1000, scoped, tag = 'output window, operand 0, single buffered']
    %7 = vsyncpa [#allocation3], 0
    %8 = vsyncpa [#allocation4], 0
    // Predicated region
    $region2: #{tpu_custom_call.1} parent=1 // pred_check
      _
    $region3: #{tpu_custom_call.1} parent=1 // pred_check_branch
      %10 = sbr.rel (0) target = $region5
    $region4: #{tpu_custom_call.1} parent=1 // pred_region
      %s12 = ssub.s32 128, 128
      %13 = vsyncadd [#allocation3], %s12
      %s15 = sshll.u32 [#allocation2], 4
      %s16 = int_to_ptr.vmem [resolvable:$true] %s15
      %18 = dma.hbm_to_vmem [thread:$0]  %s0, 128, %s16, [#allocation3]
    $region5: #{tpu_custom_call.1} parent=1 // pred_fallthru
      _
    // Predicated region
    $region6: #{tpu_custom_call.1} parent=1 // pred_check
      _
    $region7: #{tpu_custom_call.1} parent=1 // pred_check_branch
      %20 = sbr.rel (0) target = $region9
    $region8: #{tpu_custom_call.1} parent=1 // pred_region
      _
    $region9: #{tpu_custom_call.1} parent=1 // pred_fallthru
      _
    // Predicated region
    $region10: #{tpu_custom_call.1} parent=1 // pred_check
      _
    $region11: #{tpu_custom_call.1} parent=1 // pred_check_branch
      %22 = sbr.rel (0) target = $region13
    $region12: #{tpu_custom_call.1} parent=1 // pred_region
      %23 = dma.done [#allocation3], 128
    $region13: #{tpu_custom_call.1} parent=1 // pred_fallthru
      _
    %v24 = vlaneseq
    %v25 = vshrl.u32 %v24, 7
    %v26 = vcvt.s32.f32 %v25
    %v27 = vlaneseq
    %v28 = vand.u32 %v27, 127
    %v29 = vcvt.s32.f32 %v28
    %v30 = vsub.f32 %v26, %v29
    %v31 = vand.u32 2147483647, %v30
    %v32 = vadd.f32 %v31, 1e-07
    %v33 = vld [vmem:[#allocation2] sm:$0xff]
    %v34 = vld [vmem:[%s1] sm:$0x1]
    %v36 = vlaneseq
    %v37 = vshrl.u32 %v36, 7
    %v38 = vsub.s32 0, %v37
    %v39 = vrot.slane %v34, %v38
    %vm41 = vcmask 64512
    %v43 = vsel %vm41, %v32, 0
    %45 = vmatprep.subr.mxu0 0.0
    %v46 = vand.u32 %v33, 4294901760
    %47 = vmatpush1.msra.mxu0 %v46
    %48 = vmatprep.subr.mxu0 0.0
    %49 = vmatpush1.msra.mxu0 0.0
    %50 = vmatprep.subr.mxu0 0.0
    %51 = vmatpush1.msra.mxu0 0.0
    %52 = vmatprep.subr.mxu0 0.0
    %53 = vmatpush1.msra.mxu0 0.0
    %54 = vmatprep.subr.mxu0 0.0
    %55 = vmatpush1.msra.mxu0 0.0
    %56 = vmatprep.subr.mxu0 0.0
    %57 = vmatpush1.msra.mxu0 0.0
    %58 = vmatprep.subr.mxu0 0.0
    %59 = vmatpush1.msra.mxu0 0.0
    %60 = vmatprep.subr.mxu0 0.0
    %61 = vmatpush1.msra.mxu0 0.0
    %62 = vmatprep.subr.mxu0 0.0
    %63 = vmatpush1.msra.mxu0 0.0
    %64 = vmatprep.subr.mxu0 0.0
    %65 = vmatpush1.msra.mxu0 0.0
    %66 = vmatprep.subr.mxu0 0.0
    %67 = vmatpush1.msra.mxu0 0.0
    %68 = vmatprep.subr.mxu0 0.0
    %69 = vmatpush1.msra.mxu0 0.0
    %70 = vmatprep.subr.mxu0 0.0
    %71 = vmatpush1.msra.mxu0 0.0
    %72 = vmatprep.subr.mxu0 0.0
    %73 = vmatpush1.msra.mxu0 0.0
    %74 = vmatprep.subr.mxu0 0.0
    %75 = vmatpush1.msra.mxu0 0.0
    %76 = vmatprep.subr.mxu0 0.0
    %77 = vmatpush1.msra.mxu0 0.0
    %78 = vmatprep.subr.mxu0 0.0
    %79 = vmatpush1.msra.mxu0 0.0
    %80 = vmatprep.subr.mxu0 0.0
    %81 = vmatpush1.msra.mxu0 0.0
    %82 = vmatprep.subr.mxu0 0.0
    %83 = vmatpush1.msra.mxu0 0.0
    %84 = vmatprep.subr.mxu0 0.0
    %85 = vmatpush1.msra.mxu0 0.0
    %86 = vmatprep.subr.mxu0 0.0
    %87 = vmatpush1.msra.mxu0 0.0
    %88 = vmatprep.subr.mxu0 0.0
    %89 = vmatpush1.msra.mxu0 0.0
    %90 = vmatprep.subr.mxu0 0.0
    %91 = vmatpush1.msra.mxu0 0.0
    %92 = vmatprep.subr.mxu0 0.0
    %93 = vmatpush1.msra.mxu0 0.0
    %94 = vmatprep.subr.mxu0 0.0
    %95 = vmatpush1.msra.mxu0 0.0
    %96 = vmatprep.subr.mxu0 0.0
    %97 = vmatpush1.msra.mxu0 0.0
    %98 = vmatprep.subr.mxu0 0.0
    %99 = vmatpush1.msra.mxu0 0.0
    %100 = vmatprep.subr.mxu0 0.0
    %101 = vmatpush1.msra.mxu0 0.0
    %102 = vmatprep.subr.mxu0 0.0
    %103 = vmatpush1.msra.mxu0 0.0
    %104 = vmatprep.subr.mxu0 0.0
    %105 = vmatpush1.msra.mxu0 0.0
    %106 = vmatprep.subr.mxu0 0.0
    %107 = vmatpush1.msra.mxu0 0.0
    %108 = vmatprep.subr.mxu0 0.0
    %109 = vmatpush1.msra.mxu0 0.0
    %110 = vmatprep.mubr.f32.mxu0 0.0
    %v111 = vand.u32 %v43, 4294901760
    %v112 = vsub.f32 %v43, %v111
    %v113 = vand.u32 %v112, 4294901760
    %v114 = vsub.f32 %v112, %v113
    %v115 = vand.u32 %v114, 4294901760
    %116 = vmatmul.mubr.f32.gmra.mrb[0].mxu0 %v115
    %v117 = vpop.f32.mrb[0].mxu0
    %v118 = vadd.f32 %v39, %v117
    %v119 = vpop.f32.mrb[0].mxu0
    %120 = vdwg.mxu0
    %121 = vmatprep.subr.mxu0 0.0
    %v122 = vand.u32 %v33, 4294901760
    %v123 = vsub.f32 %v33, %v122
    %v124 = vand.u32 %v123, 4294901760
    %v125 = vsub.f32 %v123, %v124
    %v126 = vand.u32 %v125, 4294901760
    %127 = vmatpush1.msra.mxu0 %v126
    %128 = vmatprep.subr.mxu0 0.0
    %129 = vmatpush1.msra.mxu0 0.0
    %130 = vmatprep.subr.mxu0 0.0
    %131 = vmatpush1.msra.mxu0 0.0
    %132 = vmatprep.subr.mxu0 0.0
    %133 = vmatpush1.msra.mxu0 0.0
    %134 = vmatprep.subr.mxu0 0.0
    %135 = vmatpush1.msra.mxu0 0.0
    %136 = vmatprep.subr.mxu0 0.0
    %137 = vmatpush1.msra.mxu0 0.0
    %138 = vmatprep.subr.mxu0 0.0
    %139 = vmatpush1.msra.mxu0 0.0
    %140 = vmatprep.subr.mxu0 0.0
    %141 = vmatpush1.msra.mxu0 0.0
    %142 = vmatprep.subr.mxu0 0.0
    %143 = vmatpush1.msra.mxu0 0.0
    %144 = vmatprep.subr.mxu0 0.0
    %145 = vmatpush1.msra.mxu0 0.0
    %146 = vmatprep.subr.mxu0 0.0
    %147 = vmatpush1.msra.mxu0 0.0
    %148 = vmatprep.subr.mxu0 0.0
    %149 = vmatpush1.msra.mxu0 0.0
    %150 = vmatprep.subr.mxu0 0.0
    %151 = vmatpush1.msra.mxu0 0.0
    %152 = vmatprep.subr.mxu0 0.0
    %153 = vmatpush1.msra.mxu0 0.0
    %154 = vmatprep.subr.mxu0 0.0
    %155 = vmatpush1.msra.mxu0 0.0
    %156 = vmatprep.subr.mxu0 0.0
    %157 = vmatpush1.msra.mxu0 0.0
    %158 = vmatprep.subr.mxu0 0.0
    %159 = vmatpush1.msra.mxu0 0.0
    %160 = vmatprep.subr.mxu0 0.0
    %161 = vmatpush1.msra.mxu0 0.0
    %162 = vmatprep.subr.mxu0 0.0
    %163 = vmatpush1.msra.mxu0 0.0
    %164 = vmatprep.subr.mxu0 0.0
    %165 = vmatpush1.msra.mxu0 0.0
    %166 = vmatprep.subr.mxu0 0.0
    %167 = vmatpush1.msra.mxu0 0.0
    %168 = vmatprep.subr.mxu0 0.0
    %169 = vmatpush1.msra.mxu0 0.0
    %170 = vmatprep.subr.mxu0 0.0
    %171 = vmatpush1.msra.mxu0 0.0
    %172 = vmatprep.subr.mxu0 0.0
    %173 = vmatpush1.msra.mxu0 0.0
    %174 = vmatprep.subr.mxu0 0.0
    %175 = vmatpush1.msra.mxu0 0.0
    %176 = vmatprep.subr.mxu0 0.0
    %177 = vmatpush1.msra.mxu0 0.0
    %178 = vmatprep.subr.mxu0 0.0
    %179 = vmatpush1.msra.mxu0 0.0
    %180 = vmatprep.subr.mxu0 0.0
    %181 = vmatpush1.msra.mxu0 0.0
    %182 = vmatprep.subr.mxu0 0.0
    %183 = vmatpush1.msra.mxu0 0.0
    %184 = vmatprep.subr.mxu0 0.0
    %185 = vmatpush1.msra.mxu0 0.0
    %186 = vmatprep.subr.mxu0 0.0
    %187 = vmatpush1.msra.mxu0 0.0
    %188 = vmatprep.subr.mxu0 0.0
    %189 = vmatpush1.msra.mxu0 0.0
    %190 = vmatprep.mubr.f32.mxu0 0.0
    %v191 = vand.u32 %v43, 4294901760
    %192 = vmatmul.mubr.f32.gmra.mrb[0].mxu0 %v191
    %v193 = vpop.f32.mrb[0].mxu0
    %v194 = vadd.f32 %v118, %v193
    %v195 = vpop.f32.mrb[0].mxu0
    %196 = vdwg.mxu0
    %197 = vmatprep.subr.mxu0 0.0
    %v198 = vand.u32 %v33, 4294901760
    %v199 = vsub.f32 %v33, %v198
    %200 = vmatpush1.msra.mxu0 %v199
    %201 = vmatprep.subr.mxu0 0.0
    %202 = vmatpush1.msra.mxu0 0.0
    %203 = vmatprep.subr.mxu0 0.0
    %204 = vmatpush1.msra.mxu0 0.0
    %205 = vmatprep.subr.mxu0 0.0
    %206 = vmatpush1.msra.mxu0 0.0
    %207 = vmatprep.subr.mxu0 0.0
    %208 = vmatpush1.msra.mxu0 0.0
    %209 = vmatprep.subr.mxu0 0.0
    %210 = vmatpush1.msra.mxu0 0.0
    %211 = vmatprep.subr.mxu0 0.0
    %212 = vmatpush1.msra.mxu0 0.0
    %213 = vmatprep.subr.mxu0 0.0
    %214 = vmatpush1.msra.mxu0 0.0
    %215 = vmatprep.subr.mxu0 0.0
    %216 = vmatpush1.msra.mxu0 0.0
    %217 = vmatprep.subr.mxu0 0.0
    %218 = vmatpush1.msra.mxu0 0.0
    %219 = vmatprep.subr.mxu0 0.0
    %220 = vmatpush1.msra.mxu0 0.0
    %221 = vmatprep.subr.mxu0 0.0
    %222 = vmatpush1.msra.mxu0 0.0
    %223 = vmatprep.subr.mxu0 0.0
    %224 = vmatpush1.msra.mxu0 0.0
    %225 = vmatprep.subr.mxu0 0.0
    %226 = vmatpush1.msra.mxu0 0.0
    %227 = vmatprep.subr.mxu0 0.0
    %228 = vmatpush1.msra.mxu0 0.0
    %229 = vmatprep.subr.mxu0 0.0
    %230 = vmatpush1.msra.mxu0 0.0
    %231 = vmatprep.subr.mxu0 0.0
    %232 = vmatpush1.msra.mxu0 0.0
    %233 = vmatprep.subr.mxu0 0.0
    %234 = vmatpush1.msra.mxu0 0.0
    %235 = vmatprep.subr.mxu0 0.0
    %236 = vmatpush1.msra.mxu0 0.0
    %237 = vmatprep.subr.mxu0 0.0
    %238 = vmatpush1.msra.mxu0 0.0
    %239 = vmatprep.subr.mxu0 0.0
    %240 = vmatpush1.msra.mxu0 0.0
    %241 = vmatprep.subr.mxu0 0.0
    %242 = vmatpush1.msra.mxu0 0.0
    %243 = vmatprep.subr.mxu0 0.0
    %244 = vmatpush1.msra.mxu0 0.0
    %245 = vmatprep.subr.mxu0 0.0
    %246 = vmatpush1.msra.mxu0 0.0
    %247 = vmatprep.subr.mxu0 0.0
    %248 = vmatpush1.msra.mxu0 0.0
    %249 = vmatprep.subr.mxu0 0.0
    %250 = vmatpush1.msra.mxu0 0.0
    %251 = vmatprep.subr.mxu0 0.0
    %252 = vmatpush1.msra.mxu0 0.0
    %253 = vmatprep.subr.mxu0 0.0
    %254 = vmatpush1.msra.mxu0 0.0
    %255 = vmatprep.subr.mxu0 0.0
    %256 = vmatpush1.msra.mxu0 0.0
    %257 = vmatprep.subr.mxu0 0.0
    %258 = vmatpush1.msra.mxu0 0.0
    %259 = vmatprep.subr.mxu0 0.0
    %260 = vmatpush1.msra.mxu0 0.0
    %261 = vmatprep.subr.mxu0 0.0
    %262 = vmatpush1.msra.mxu0 0.0
    %263 = vmatprep.mubr.f32.mxu0 0.0
    %v264 = vand.u32 %v43, 4294901760
    %v265 = vsub.f32 %v43, %v264
    %266 = vmatmul.mubr.f32.gmra.mrb[0].mxu0 %v265
    %v267 = vpop.f32.mrb[0].mxu0
    %v268 = vadd.f32 %v194, %v267
    %v269 = vpop.f32.mrb[0].mxu0
    %270 = vdwg.mxu0
    %271 = vmatprep.subr.mxu0 0.0
    %v272 = vand.u32 %v33, 4294901760
    %273 = vmatpush1.msra.mxu0 %v272
    %274 = vmatprep.subr.mxu0 0.0
    %275 = vmatpush1.msra.mxu0 0.0
    %276 = vmatprep.subr.mxu0 0.0
    %277 = vmatpush1.msra.mxu0 0.0
    %278 = vmatprep.subr.mxu0 0.0
    %279 = vmatpush1.msra.mxu0 0.0
    %280 = vmatprep.subr.mxu0 0.0
    %281 = vmatpush1.msra.mxu0 0.0
    %282 = vmatprep.subr.mxu0 0.0
    %283 = vmatpush1.msra.mxu0 0.0
    %284 = vmatprep.subr.mxu0 0.0
    %285 = vmatpush1.msra.mxu0 0.0
    %286 = vmatprep.subr.mxu0 0.0
    %287 = vmatpush1.msra.mxu0 0.0
    %288 = vmatprep.subr.mxu0 0.0
    %289 = vmatpush1.msra.mxu0 0.0
    %290 = vmatprep.subr.mxu0 0.0
    %291 = vmatpush1.msra.mxu0 0.0
    %292 = vmatprep.subr.mxu0 0.0
    %293 = vmatpush1.msra.mxu0 0.0
    %294 = vmatprep.subr.mxu0 0.0
    %295 = vmatpush1.msra.mxu0 0.0
    %296 = vmatprep.subr.mxu0 0.0
    %297 = vmatpush1.msra.mxu0 0.0
    %298 = vmatprep.subr.mxu0 0.0
    %299 = vmatpush1.msra.mxu0 0.0
    %300 = vmatprep.subr.mxu0 0.0
    %301 = vmatpush1.msra.mxu0 0.0
    %302 = vmatprep.subr.mxu0 0.0
    %303 = vmatpush1.msra.mxu0 0.0
    %304 = vmatprep.subr.mxu0 0.0
    %305 = vmatpush1.msra.mxu0 0.0
    %306 = vmatprep.subr.mxu0 0.0
    %307 = vmatpush1.msra.mxu0 0.0
    %308 = vmatprep.subr.mxu0 0.0
    %309 = vmatpush1.msra.mxu0 0.0
    %310 = vmatprep.subr.mxu0 0.0
    %311 = vmatpush1.msra.mxu0 0.0
    %312 = vmatprep.subr.mxu0 0.0
    %313 = vmatpush1.msra.mxu0 0.0
    %314 = vmatprep.subr.mxu0 0.0
    %315 = vmatpush1.msra.mxu0 0.0
    %316 = vmatprep.subr.mxu0 0.0
    %317 = vmatpush1.msra.mxu0 0.0
    %318 = vmatprep.subr.mxu0 0.0
    %319 = vmatpush1.msra.mxu0 0.0
    %320 = vmatprep.subr.mxu0 0.0
    %321 = vmatpush1.msra.mxu0 0.0
    %322 = vmatprep.subr.mxu0 0.0
    %323 = vmatpush1.msra.mxu0 0.0
    %324 = vmatprep.subr.mxu0 0.0
    %325 = vmatpush1.msra.mxu0 0.0
    %326 = vmatprep.subr.mxu0 0.0
    %327 = vmatpush1.msra.mxu0 0.0
    %328 = vmatprep.subr.mxu0 0.0
    %329 = vmatpush1.msra.mxu0 0.0
    %330 = vmatprep.subr.mxu0 0.0
    %331 = vmatpush1.msra.mxu0 0.0
    %332 = vmatprep.subr.mxu0 0.0
    %333 = vmatpush1.msra.mxu0 0.0
    %334 = vmatprep.subr.mxu0 0.0
    %335 = vmatpush1.msra.mxu0 0.0
    %336 = vmatprep.mubr.f32.mxu0 0.0
    %v337 = vand.u32 %v43, 4294901760
    %v338 = vsub.f32 %v43, %v337
    %v339 = vand.u32 %v338, 4294901760
    %340 = vmatmul.mubr.f32.gmra.mrb[0].mxu0 %v339
    %v341 = vpop.f32.mrb[0].mxu0
    %v342 = vadd.f32 %v268, %v341
    %v343 = vpop.f32.mrb[0].mxu0
    %344 = vdwg.mxu0
    %345 = vmatprep.subr.mxu0 0.0
    %v346 = vand.u32 %v33, 4294901760
    %v347 = vsub.f32 %v33, %v346
    %v348 = vand.u32 %v347, 4294901760
    %349 = vmatpush1.msra.mxu0 %v348
    %350 = vmatprep.subr.mxu0 0.0
    %351 = vmatpush1.msra.mxu0 0.0
    %352 = vmatprep.subr.mxu0 0.0
    %353 = vmatpush1.msra.mxu0 0.0
    %354 = vmatprep.subr.mxu0 0.0
    %355 = vmatpush1.msra.mxu0 0.0
    %356 = vmatprep.subr.mxu0 0.0
    %357 = vmatpush1.msra.mxu0 0.0
    %358 = vmatprep.subr.mxu0 0.0
    %359 = vmatpush1.msra.mxu0 0.0
    %360 = vmatprep.subr.mxu0 0.0
    %361 = vmatpush1.msra.mxu0 0.0
    %362 = vmatprep.subr.mxu0 0.0
    %363 = vmatpush1.msra.mxu0 0.0
    %364 = vmatprep.subr.mxu0 0.0
    %365 = vmatpush1.msra.mxu0 0.0
    %366 = vmatprep.subr.mxu0 0.0
    %367 = vmatpush1.msra.mxu0 0.0
    %368 = vmatprep.subr.mxu0 0.0
    %369 = vmatpush1.msra.mxu0 0.0
    %370 = vmatprep.subr.mxu0 0.0
    %371 = vmatpush1.msra.mxu0 0.0
    %372 = vmatprep.subr.mxu0 0.0
    %373 = vmatpush1.msra.mxu0 0.0
    %374 = vmatprep.subr.mxu0 0.0
    %375 = vmatpush1.msra.mxu0 0.0
    %376 = vmatprep.subr.mxu0 0.0
    %377 = vmatpush1.msra.mxu0 0.0
    %378 = vmatprep.subr.mxu0 0.0
    %379 = vmatpush1.msra.mxu0 0.0
    %380 = vmatprep.subr.mxu0 0.0
    %381 = vmatpush1.msra.mxu0 0.0
    %382 = vmatprep.subr.mxu0 0.0
    %383 = vmatpush1.msra.mxu0 0.0
    %384 = vmatprep.subr.mxu0 0.0
    %385 = vmatpush1.msra.mxu0 0.0
    %386 = vmatprep.subr.mxu0 0.0
    %387 = vmatpush1.msra.mxu0 0.0
    %388 = vmatprep.subr.mxu0 0.0
    %389 = vmatpush1.msra.mxu0 0.0
    %390 = vmatprep.subr.mxu0 0.0
    %391 = vmatpush1.msra.mxu0 0.0
    %392 = vmatprep.subr.mxu0 0.0
    %393 = vmatpush1.msra.mxu0 0.0
    %394 = vmatprep.subr.mxu0 0.0
    %395 = vmatpush1.msra.mxu0 0.0
    %396 = vmatprep.subr.mxu0 0.0
    %397 = vmatpush1.msra.mxu0 0.0
    %398 = vmatprep.subr.mxu0 0.0
    %399 = vmatpush1.msra.mxu0 0.0
    %400 = vmatprep.subr.mxu0 0.0
    %401 = vmatpush1.msra.mxu0 0.0
    %402 = vmatprep.subr.mxu0 0.0
    %403 = vmatpush1.msra.mxu0 0.0
    %404 = vmatprep.subr.mxu0 0.0
    %405 = vmatpush1.msra.mxu0 0.0
    %406 = vmatprep.subr.mxu0 0.0
    %407 = vmatpush1.msra.mxu0 0.0
    %408 = vmatprep.subr.mxu0 0.0
    %409 = vmatpush1.msra.mxu0 0.0
    %410 = vmatprep.subr.mxu0 0.0
    %411 = vmatpush1.msra.mxu0 0.0
    %412 = vmatprep.mubr.f32.mxu0 0.0
    %v413 = vand.u32 %v43, 4294901760
    %414 = vmatmul.mubr.f32.gmra.mrb[0].mxu0 %v413
    %v415 = vpop.f32.mrb[0].mxu0
    %v416 = vadd.f32 %v342, %v415
    %v417 = vpop.f32.mrb[0].mxu0
    %418 = vdwg.mxu0
    %419 = vmatprep.subr.mxu0 0.0
    %v420 = vand.u32 %v33, 4294901760
    %421 = vmatpush1.msra.mxu0 %v420
    %422 = vmatprep.subr.mxu0 0.0
    %423 = vmatpush1.msra.mxu0 0.0
    %424 = vmatprep.subr.mxu0 0.0
    %425 = vmatpush1.msra.mxu0 0.0
    %426 = vmatprep.subr.mxu0 0.0
    %427 = vmatpush1.msra.mxu0 0.0
    %428 = vmatprep.subr.mxu0 0.0
    %429 = vmatpush1.msra.mxu0 0.0
    %430 = vmatprep.subr.mxu0 0.0
    %431 = vmatpush1.msra.mxu0 0.0
    %432 = vmatprep.subr.mxu0 0.0
    %433 = vmatpush1.msra.mxu0 0.0
    %434 = vmatprep.subr.mxu0 0.0
    %435 = vmatpush1.msra.mxu0 0.0
    %436 = vmatprep.subr.mxu0 0.0
    %437 = vmatpush1.msra.mxu0 0.0
    %438 = vmatprep.subr.mxu0 0.0
    %439 = vmatpush1.msra.mxu0 0.0
    %440 = vmatprep.subr.mxu0 0.0
    %441 = vmatpush1.msra.mxu0 0.0
    %442 = vmatprep.subr.mxu0 0.0
    %443 = vmatpush1.msra.mxu0 0.0
    %444 = vmatprep.subr.mxu0 0.0
    %445 = vmatpush1.msra.mxu0 0.0
    %446 = vmatprep.subr.mxu0 0.0
    %447 = vmatpush1.msra.mxu0 0.0
    %448 = vmatprep.subr.mxu0 0.0
    %449 = vmatpush1.msra.mxu0 0.0
    %450 = vmatprep.subr.mxu0 0.0
    %451 = vmatpush1.msra.mxu0 0.0
    %452 = vmatprep.subr.mxu0 0.0
    %453 = vmatpush1.msra.mxu0 0.0
    %454 = vmatprep.subr.mxu0 0.0
    %455 = vmatpush1.msra.mxu0 0.0
    %456 = vmatprep.subr.mxu0 0.0
    %457 = vmatpush1.msra.mxu0 0.0
    %458 = vmatprep.subr.mxu0 0.0
    %459 = vmatpush1.msra.mxu0 0.0
    %460 = vmatprep.subr.mxu0 0.0
    %461 = vmatpush1.msra.mxu0 0.0
    %462 = vmatprep.subr.mxu0 0.0
    %463 = vmatpush1.msra.mxu0 0.0
    %464 = vmatprep.subr.mxu0 0.0
    %465 = vmatpush1.msra.mxu0 0.0
    %466 = vmatprep.subr.mxu0 0.0
    %467 = vmatpush1.msra.mxu0 0.0
    %468 = vmatprep.subr.mxu0 0.0
    %469 = vmatpush1.msra.mxu0 0.0
    %470 = vmatprep.subr.mxu0 0.0
    %471 = vmatpush1.msra.mxu0 0.0
    %472 = vmatprep.subr.mxu0 0.0
    %473 = vmatpush1.msra.mxu0 0.0
    %474 = vmatprep.subr.mxu0 0.0
    %475 = vmatpush1.msra.mxu0 0.0
    %476 = vmatprep.subr.mxu0 0.0
    %477 = vmatpush1.msra.mxu0 0.0
    %478 = vmatprep.subr.mxu0 0.0
    %479 = vmatpush1.msra.mxu0 0.0
    %480 = vmatprep.subr.mxu0 0.0
    %481 = vmatpush1.msra.mxu0 0.0
    %482 = vmatprep.subr.mxu0 0.0
    %483 = vmatpush1.msra.mxu0 0.0
    %484 = vmatprep.mubr.f32.mxu0 0.0
    %v485 = vand.u32 %v43, 4294901760
    %486 = vmatmul.mubr.f32.gmra.mrb[0].mxu0 %v485
    %v487 = vpop.f32.mrb[0].mxu0
    %v488 = vadd.f32 %v416, %v487
    %v489 = vpop.f32.mrb[0].mxu0
    %490 = vdwg.mxu0
    %v491 = vmax.f32 %v488, 0.0
    %v492 = vadd.f32 %v491, 2e-07
    %v493 = vlog2.pop %v492
    %v494 = vmul.f32 %v493, 0.6931472
    %v495 = vrcp.pop %v494
    %v496 = vmul.f32 1.0, %v495
    %497 = vst.msk [vmem:[#allocation5] sm:$0xff] %vm41, %v496
    // Predicated region
    $region14: #{tpu_custom_call.1} parent=1 // pred_check
      _
    $region15: #{tpu_custom_call.1} parent=1 // pred_check_branch
      %499 = sbr.rel (0) target = $region17
    $region16: #{tpu_custom_call.1} parent=1 // pred_region
      %s501 = ssub.s32 128, 128
      %502 = vsyncadd [#allocation4], %s501
      %s504 = sshll.u32 [#allocation5], 4
      %s505 = int_to_ptr.vmem [resolvable:$true] %s504
      %507 = dma.vmem_to_hbm [thread:$0]  %s505, 128, %s2, [#allocation4]
    $region17: #{tpu_custom_call.1} parent=1 // pred_fallthru
      _
    // Predicated region
    $region18: #{tpu_custom_call.1} parent=1 // pred_check
      _
    $region19: #{tpu_custom_call.1} parent=1 // pred_check_branch
      %509 = sbr.rel (0) target = $region21
    $region20: #{tpu_custom_call.1} parent=1 // pred_region
      %510 = dma.done [#allocation4], 128
    $region21: #{tpu_custom_call.1} parent=1 // pred_fallthru
      _
    %511 = vsyncpa [#allocation3], 1
    %512 = vsyncpa [#allocation4], 1

</llo_original>
